<compile_context>
chip_gen: v5e
topology: v5e:2x2
jax: 0.10.0
libtpu: 0.0.40
codegen_flags: <defaults>
</compile_context>

<pallas_src>
import functools

import jax
import jax.numpy as jnp
from jax.experimental import pallas as pl
from jax.experimental.pallas import tpu as pltpu


def adult_classifier_kernel(xT_ref, w1t_ref, b1_ref, w2_ref, b2_ref, o_ref):
    # fc1: h^T = W1^T @ x^T on the MXU (bf16 in, f32 accumulate); bias + ReLU on the VPU.
    h = jnp.dot(w1t_ref[...], xT_ref[...],
                preferred_element_type=jnp.float32)                    # (Hp, TB) f32
    h = jnp.maximum(h + b1_ref[...], 0.0)                              # (Hp, 1) bias bcast

    # fc2 (Hp -> 1): VPU multiply against the (Hp, 1) w2 column + sublane (XLU) reduction
    # -> lane-dense (1, TB) row.  No second MXU matmul, no masked single-lane stores.
    z = jnp.sum(h * w2_ref[...], axis=0, keepdims=True) + b2_ref[...]  # (1, TB)

    # sigmoid = 1 / (1 + exp(-z)); exp and approx reciprocal both use the EUP slot.
    o_ref[...] = pl.reciprocal(1.0 + jnp.exp(-z), approx=True)


def _round_up(n: int, m: int) -> int:
    return ((n + m - 1) // m) * m


def prepare_params(w1, b1, w2, b2):
    """One-time (init-time) weight prep, hoisted out of the per-call path.

    w1: (IN, H); b1: (H,) or (1, H); w2: (H, 1); b2: (1,) or (1, 1).
    Returns (w1t, b1c, w2c, b2r):
      w1t (Hp, IN) bf16, b1c/w2c (Hp, 1) f32, b2r (1, 1) f32, with H padded to Hp=256.
    """
    IN, H = w1.shape
    Hp = _round_up(H, 128)
    w1t = jnp.zeros((Hp, IN), jnp.bfloat16).at[:H, :].set(w1.astype(jnp.bfloat16).T)
    b1c = jnp.zeros((Hp, 1), jnp.float32).at[:H, :].set(b1.reshape(H, 1).astype(jnp.float32))
    w2c = jnp.zeros((Hp, 1), jnp.float32).at[:H, :].set(w2.reshape(H, 1).astype(jnp.float32))
    b2r = b2.reshape(1, 1).astype(jnp.float32)
    return w1t, b1c, w2c, b2r


def _choose_batch_tiling(B: int, block_batch: int):
    """Pick (tile_rows, num_tiles): even & balanced multi-tile grid for large batches,
    a single whole-batch tile (pad < 8 rows) for small ones."""
    if B < 2048:
        # Grid of 1: at this size the kernel is a few microseconds; a second v7x TC
        # would not pay for the extra pad rows it requires.
        return _round_up(B, 8), 1
    n_tiles = pl.cdiv(B, block_batch)
    if n_tiles % 2:
        n_tiles += 1                      # even tile count -> balanced across v7x's 2 TCs
    tb = _round_up(pl.cdiv(B, n_tiles), 128)   # lane-dim blocks must be 128-multiples
    return tb, n_tiles


def adult_classifier(x, params, *, block_batch: int = 4096):
    """Fused forward: sigmoid(relu(x @ W1 + b1) @ W2 + b2).  x: (B, IN) -> (B, 1) f32."""
    w1t, b1c, w2c, b2r = params
    B, IN = x.shape
    Hp = w1t.shape[0]

    TB, n_tiles = _choose_batch_tiling(B, block_batch)
    Bp = TB * n_tiles

    # Transposed + bf16 + (small) pad: fuses into a single pass over x under jit.
    xT = x.astype(jnp.bfloat16).T                       # (IN, B)
    if Bp != B:
        xT = jnp.pad(xT, ((0, 0), (0, Bp - B)))

    cost = pl.CostEstimate(
        flops=2 * Bp * Hp * (IN + 1),
        transcendentals=2 * Bp,                          # exp + approx reciprocal
        bytes_accessed=int(2 * Bp * IN + 2 * Hp * IN + 4 * (2 * Hp + 1) + 4 * Bp),
    )

    out = pl.pallas_call(
        adult_classifier_kernel,
        out_shape=jax.ShapeDtypeStruct((1, Bp), jnp.float32),
        grid_spec=pltpu.PrefetchScalarGridSpec(
            num_scalar_prefetch=0,
            grid=(n_tiles,),
            in_specs=[
                pl.BlockSpec((IN, TB), lambda i: (0, i)),   # x^T batch tiles (bf16)
                pl.BlockSpec((Hp, IN), lambda i: (0, 0)),   # VMEM-resident W1^T (bf16)
                pl.BlockSpec((Hp, 1), lambda i: (0, 0)),    # b1 column (f32)
                pl.BlockSpec((Hp, 1), lambda i: (0, 0)),    # w2 column (f32)
                pl.BlockSpec((1, 1), lambda i: (0, 0)),     # b2 scalar
            ],
            out_specs=pl.BlockSpec((1, TB), lambda i: (0, i)),   # lane-dense output row
        ),
        compiler_params=pltpu.CompilerParams(
            dimension_semantics=("parallel",),      # shard batch tiles across v7x's 2 TCs
            vmem_limit_bytes=48 * 1024 * 1024,      # v5e's 16 MiB scoped default is too small
        ),
        cost_estimate=cost,
    )(xT, w1t, b1c, w2c, b2r)

    # Restore the module's (B, 1) contract; pure layout plumbing at the JAX boundary.
    return out[0, :B].reshape(B, 1)


if __name__ == "__main__":
    # input_size = 12 features (8 categorical + 4 numerical from the Adult dataset),
    # hidden_size = 250, output_size = 1.
    B, IN, H, OUT = 8, 12, 250, 1

    key = jax.random.PRNGKey(0)
    kx, kw1, kb1, kw2, kb2, kx2 = jax.random.split(key, 6)

    # nn.Linear-style U(-1/sqrt(fan_in), 1/sqrt(fan_in)) init.
    lim1 = 1.0 / float(IN) ** 0.5
    w1 = jax.random.uniform(kw1, (IN, H), minval=-lim1, maxval=lim1, dtype=jnp.float32)
    b1 = jax.random.uniform(kb1, (H,), minval=-lim1, maxval=lim1, dtype=jnp.float32)
    lim2 = 1.0 / float(H) ** 0.5
    w2 = jax.random.uniform(kw2, (H, OUT), minval=-lim2, maxval=lim2, dtype=jnp.float32)
    b2 = jax.random.uniform(kb2, (OUT,), minval=-lim2, maxval=lim2, dtype=jnp.float32)

    params = prepare_params(w1, b1, w2, b2)          # one-time, hoisted weight prep
    fwd = jax.jit(functools.partial(adult_classifier, block_batch=4096))

    def ref_fwd(xx):
        return jax.nn.sigmoid(jnp.maximum(xx @ w1 + b1, 0.0) @ w2 + b2)

    # Small batch: single whole-batch tile (grid of 1).
    x = jax.random.normal(kx, (B, IN), dtype=jnp.float32)
    out = jax.block_until_ready(fwd(x, params))
    assert out.shape == (B, OUT)
    assert jnp.allclose(out, ref_fwd(x), atol=5e-3), "small-batch mismatch vs reference"

    # Larger batch: exercises the even, balanced 2-tile grid + padded tail columns.
    B2 = 2600
    x2 = jax.random.normal(kx2, (B2, IN), dtype=jnp.float32)
    out2 = jax.block_until_ready(fwd(x2, params))
    assert out2.shape == (B2, OUT)
    assert jnp.allclose(out2, ref_fwd(x2), atol=5e-3), "tiled-batch mismatch vs reference"

    print("KERNEL_OK")
</pallas_src>

<mosaic_0001>
module attributes {stable_mosaic.version = 11 : i64} {
  func.func @adult_classifier_kernel(%arg0: i32, %arg1: memref<12x8xbf16, #tpu.memory_space<vmem>>, %arg2: memref<256x12xbf16, #tpu.memory_space<vmem>>, %arg3: memref<256x1xf32, #tpu.memory_space<vmem>>, %arg4: memref<256x1xf32, #tpu.memory_space<vmem>>, %arg5: memref<1x1xf32, #tpu.memory_space<vmem>>, %arg6: memref<1x8xf32, #tpu.memory_space<vmem>>) attributes {dimension_semantics = [#tpu.dimension_semantics<parallel>], iteration_bounds = array<i64: 1>, scalar_prefetch = 0 : i64, scratch_operands = 0 : i64, tpu.core_type = #tpu.core_type<tc>, window_params = [{transform_indices = @transform_0, window_bounds = array<i64: 12, 8>}, {pipeline_mode = #tpu.pipeline_mode<synchronous>, transform_indices = @transform_1, window_bounds = array<i64: 256, 12>}, {pipeline_mode = #tpu.pipeline_mode<synchronous>, transform_indices = @transform_2, window_bounds = array<i64: 256, 1>}, {pipeline_mode = #tpu.pipeline_mode<synchronous>, transform_indices = @transform_3, window_bounds = array<i64: 256, 1>}, {pipeline_mode = #tpu.pipeline_mode<synchronous>, transform_indices = @transform_4, window_bounds = array<i64: 1, 1>}, {transform_indices = @transform_5, window_bounds = array<i64: 1, 8>}]} {
    %c0 = arith.constant 0 : index
    %c0_0 = arith.constant 0 : index
    %0 = vector.load %arg2[%c0, %c0_0] : memref<256x12xbf16, #tpu.memory_space<vmem>>, vector<256x12xbf16>
    %c0_1 = arith.constant 0 : index
    %c0_2 = arith.constant 0 : index
    %1 = vector.load %arg1[%c0_1, %c0_2] : memref<12x8xbf16, #tpu.memory_space<vmem>>, vector<12x8xbf16>
    %cst = arith.constant dense<0.000000e+00> : vector<256x8xf32>
    %2 = tpu.matmul %0, %1, %cst {dimension_numbers = #tpu.dot_dimension_numbers<[1], [0], [0], [1], [0, 0, 1, 1], [], []>} : vector<256x12xbf16>, vector<12x8xbf16>, vector<256x8xf32> -> vector<256x8xf32>
    %c0_3 = arith.constant 0 : index
    %c0_4 = arith.constant 0 : index
    %3 = vector.load %arg3[%c0_3, %c0_4] : memref<256x1xf32, #tpu.memory_space<vmem>>, vector<256x1xf32>
    %4 = vector.broadcast %3 : vector<256x1xf32> to vector<256x8xf32>
    %5 = arith.addf %2, %4 : vector<256x8xf32>
    %cst_5 = arith.constant 0.000000e+00 : f32
    %6 = vector.broadcast %cst_5 : f32 to vector<256x8xf32>
    %7 = arith.maximumf %5, %6 : vector<256x8xf32>
    %c0_6 = arith.constant 0 : index
    %c0_7 = arith.constant 0 : index
    %8 = vector.load %arg4[%c0_6, %c0_7] : memref<256x1xf32, #tpu.memory_space<vmem>>, vector<256x1xf32>
    %9 = vector.broadcast %8 : vector<256x1xf32> to vector<256x8xf32>
    %10 = arith.mulf %7, %9 : vector<256x8xf32>
    %cst_8 = arith.constant dense<0.000000e+00> : vector<8xf32>
    %11 = vector.multi_reduction <add>, %10, %cst_8 [0] : vector<256x8xf32> to vector<8xf32>
    %12 = vector.shape_cast %11 : vector<8xf32> to vector<1x8xf32>
    %c0_9 = arith.constant 0 : index
    %c0_10 = arith.constant 0 : index
    %13 = vector.load %arg5[%c0_9, %c0_10] : memref<1x1xf32, #tpu.memory_space<vmem>>, vector<1x1xf32>
    %14 = vector.broadcast %13 : vector<1x1xf32> to vector<1x8xf32>
    %15 = arith.addf %12, %14 : vector<1x8xf32>
    %cst_11 = arith.constant 0.000000e+00 : f32
    %16 = vector.broadcast %cst_11 : f32 to vector<1x8xf32>
    %17 = arith.subf %16, %15 : vector<1x8xf32>
    %18 = math.exp %17 : vector<1x8xf32>
    %cst_12 = arith.constant 1.000000e+00 : f32
    %19 = vector.broadcast %cst_12 : f32 to vector<1x8xf32>
    %20 = arith.addf %19, %18 : vector<1x8xf32>
    %21 = tpu.reciprocal %20 {approx = true} : vector<1x8xf32> -> vector<1x8xf32>
    %c0_13 = arith.constant 0 : index
    %c0_14 = arith.constant 0 : index
    %22 = vector.load %arg6[%c0_13, %c0_14] : memref<1x8xf32, #tpu.memory_space<vmem>>, vector<1x8xf32>
    tpu.vector_store %arg6[%c0_13, %c0_14], %21 {strides = array<i32>} : memref<1x8xf32, #tpu.memory_space<vmem>>, vector<1x8xf32>,
    return
  }
  func.func @transform_0(%arg0: i32) -> (i32, i32) {
    %c0_i32 = arith.constant 0 : i32
    %c0_i32_0 = arith.constant 0 : i32
    return %c0_i32, %arg0 : i32, i32
  }
  func.func @transform_1(%arg0: i32) -> (i32, i32) {
    %c0_i32 = arith.constant 0 : i32
    %c0_i32_0 = arith.constant 0 : i32
    %c0_i32_1 = arith.constant 0 : i32
    return %c0_i32, %c0_i32_0 : i32, i32
  }
  func.func @transform_2(%arg0: i32) -> (i32, i32) {
    %c0_i32 = arith.constant 0 : i32
    %c0_i32_0 = arith.constant 0 : i32
    %c0_i32_1 = arith.constant 0 : i32
    return %c0_i32, %c0_i32_0 : i32, i32
  }
  func.func @transform_3(%arg0: i32) -> (i32, i32) {
    %c0_i32 = arith.constant 0 : i32
    %c0_i32_0 = arith.constant 0 : i32
    %c0_i32_1 = arith.constant 0 : i32
    return %c0_i32, %c0_i32_0 : i32, i32
  }
  func.func @transform_4(%arg0: i32) -> (i32, i32) {
    %c0_i32 = arith.constant 0 : i32
    %c0_i32_0 = arith.constant 0 : i32
    %c0_i32_1 = arith.constant 0 : i32
    return %c0_i32, %c0_i32_0 : i32, i32
  }
  func.func @transform_5(%arg0: i32) -> (i32, i32) {
    %c0_i32 = arith.constant 0 : i32
    %c0_i32_0 = arith.constant 0 : i32
    return %c0_i32, %arg0 : i32, i32
  }
}

</mosaic_0001>

<llo_original>
// kernel: adult_classifier.1
$region0: #{adult_classifier.1}
  #allocation0 [shape = 'u32[]', space=smem, size = 0x4, offset = 0x4, fixed_abs, tag = 'smem constant byte address 0x4 - core index']
  #allocation1 [shape = 'u32[72,128]{1,0:T(1,128)}', space=vmem, size = 0x9000, scoped, tag = 'internal scratch']
  #allocation2 [shape = 'f32[1,1]{1,0:T(1,128)S(1)}', space=vmem, size = 0x200, scoped, tag = 'scoped memory for adult_classifier.1']
  %s0 = inlined_call_operand.vmem [shape: bf16[12,8], index: 0, kind: input, shape index: {}]
  %s1 = inlined_call_operand.vmem [shape: bf16[256,12], index: 1, kind: input, shape index: {}]
  %s2 = inlined_call_operand.vmem [shape: f32[256,1], index: 2, kind: input, shape index: {}]
  %s3 = inlined_call_operand.vmem [shape: f32[256,1], index: 3, kind: input, shape index: {}]
  %s4 = inlined_call_operand.<no memory space> [shape: f32[1,1], index: 4, kind: input, shape index: {}]
  %s5 = inlined_call_operand.hbm [shape: f32[1,8], index: 5, kind: output, shape index: {}]
  %s6 = sld [smem:[#allocation0]]
  $region30: #{adult_classifier.1} parent=0
    _
  %s8 = ssub.s32 1, %s6
  %s9 = scalar_select 0, %s8, %s6
  %v10 = vstv %s4
  %11 = vst [vmem:[#allocation2] sm:$0x1] %v10
  $region1: #{adult_classifier.1} parent=0
    #allocation3 [shape = 'u8[512]{0}', space=vmem, size = 0x400, scoped, tag = 'output window, operand 0, single buffered']
    #allocation4 [shape = 's32[1]{0}', space=sflag, size = 0x4, scoped, tag = 'scoped memory for adult_classifier.1']
    %12 = vsyncpa [#allocation4], 0
    // Predicated region
    $region2: #{adult_classifier.1} parent=1 // pred_check
      _
    $region3: #{adult_classifier.1} parent=1 // pred_check_branch
      %14 = sbr.rel (0) target = $region5
    $region4: #{adult_classifier.1} parent=1 // pred_region
      _
    $region5: #{adult_classifier.1} parent=1 // pred_fallthru
      _
    // Predicated region
    $region6: #{adult_classifier.1} parent=1 // pred_check
      _
    $region7: #{adult_classifier.1} parent=1 // pred_check_branch
      %16 = sbr.rel (0) target = $region9
    $region8: #{adult_classifier.1} parent=1 // pred_region
      _
    $region9: #{adult_classifier.1} parent=1 // pred_fallthru
      _
    // Predicated region
    $region10: #{adult_classifier.1} parent=1 // pred_check
      _
    $region11: #{adult_classifier.1} parent=1 // pred_check_branch
      %18 = sbr.rel (0) target = $region13
    $region12: #{adult_classifier.1} parent=1 // pred_region
      _
    $region13: #{adult_classifier.1} parent=1 // pred_fallthru
      _
    // Predicated region
    $region14: #{adult_classifier.1} parent=1 // pred_check
      _
    $region15: #{adult_classifier.1} parent=1 // pred_check_branch
      %20 = sbr.rel (0) target = $region17
    $region16: #{adult_classifier.1} parent=1 // pred_region
      _
    $region17: #{adult_classifier.1} parent=1 // pred_fallthru
      _
    // Predicated region
    $region18: #{adult_classifier.1} parent=1 // pred_check
      _
    $region19: #{adult_classifier.1} parent=1 // pred_check_branch
      %22 = sbr.rel (0) target = $region21
    $region20: #{adult_classifier.1} parent=1 // pred_region
      _
    $region21: #{adult_classifier.1} parent=1 // pred_fallthru
      _
    %v24 = vld [vmem:[%s1] sm:$0xf]
    %v25 = vld [vmem:[%s1 + $0x4] sm:$0xf]
    %v26 = vld [vmem:[%s1 + $0x8] sm:$0xf]
    %v27 = vld [vmem:[%s1 + $0xc] sm:$0xf]
    %v28 = vld [vmem:[%s1 + $0x10] sm:$0xf]
    %v29 = vld [vmem:[%s1 + $0x14] sm:$0xf]
    %v30 = vld [vmem:[%s1 + $0x18] sm:$0xf]
    %v31 = vld [vmem:[%s1 + $0x1c] sm:$0xf]
    %v32 = vld [vmem:[%s1 + $0x20] sm:$0xf]
    %v33 = vld [vmem:[%s1 + $0x24] sm:$0xf]
    %v34 = vld [vmem:[%s1 + $0x28] sm:$0xf]
    %v35 = vld [vmem:[%s1 + $0x2c] sm:$0xf]
    %v36 = vld [vmem:[%s1 + $0x30] sm:$0xf]
    %v37 = vld [vmem:[%s1 + $0x34] sm:$0xf]
    %v38 = vld [vmem:[%s1 + $0x38] sm:$0xf]
    %v39 = vld [vmem:[%s1 + $0x3c] sm:$0xf]
    %v40 = vld [vmem:[%s1 + $0x40] sm:$0xf]
    %v41 = vld [vmem:[%s1 + $0x44] sm:$0xf]
    %v42 = vld [vmem:[%s1 + $0x48] sm:$0xf]
    %v43 = vld [vmem:[%s1 + $0x4c] sm:$0xf]
    %v44 = vld [vmem:[%s1 + $0x50] sm:$0xf]
    %v45 = vld [vmem:[%s1 + $0x54] sm:$0xf]
    %v46 = vld [vmem:[%s1 + $0x58] sm:$0xf]
    %v47 = vld [vmem:[%s1 + $0x5c] sm:$0xf]
    %v48 = vld [vmem:[%s1 + $0x60] sm:$0xf]
    %v49 = vld [vmem:[%s1 + $0x64] sm:$0xf]
    %v50 = vld [vmem:[%s1 + $0x68] sm:$0xf]
    %v51 = vld [vmem:[%s1 + $0x6c] sm:$0xf]
    %v52 = vld [vmem:[%s1 + $0x70] sm:$0xf]
    %v53 = vld [vmem:[%s1 + $0x74] sm:$0xf]
    %v54 = vld [vmem:[%s1 + $0x78] sm:$0xf]
    %v55 = vld [vmem:[%s1 + $0x7c] sm:$0xf]
    %v56 = vld [vmem:[%s0] sm:$0xf]
    %v57 = vld [vmem:[%s0 + $0x4] sm:$0x3]
    %v58 = vld [vmem:[%s2] sm:$0xff]
    %v59 = vld [vmem:[%s2 + $0x8] sm:$0xff]
    %v60 = vld [vmem:[%s2 + $0x10] sm:$0xff]
    %v61 = vld [vmem:[%s2 + $0x18] sm:$0xff]
    %v62 = vld [vmem:[%s2 + $0x20] sm:$0xff]
    %v63 = vld [vmem:[%s2 + $0x28] sm:$0xff]
    %v64 = vld [vmem:[%s2 + $0x30] sm:$0xff]
    %v65 = vld [vmem:[%s2 + $0x38] sm:$0xff]
    %v66 = vld [vmem:[%s2 + $0x40] sm:$0xff]
    %v67 = vld [vmem:[%s2 + $0x48] sm:$0xff]
    %v68 = vld [vmem:[%s2 + $0x50] sm:$0xff]
    %v69 = vld [vmem:[%s2 + $0x58] sm:$0xff]
    %v70 = vld [vmem:[%s2 + $0x60] sm:$0xff]
    %v71 = vld [vmem:[%s2 + $0x68] sm:$0xff]
    %v72 = vld [vmem:[%s2 + $0x70] sm:$0xff]
    %v73 = vld [vmem:[%s2 + $0x78] sm:$0xff]
    %v74 = vld [vmem:[%s2 + $0x80] sm:$0xff]
    %v75 = vld [vmem:[%s2 + $0x88] sm:$0xff]
    %v76 = vld [vmem:[%s2 + $0x90] sm:$0xff]
    %v77 = vld [vmem:[%s2 + $0x98] sm:$0xff]
    %v78 = vld [vmem:[%s2 + $0xa0] sm:$0xff]
    %v79 = vld [vmem:[%s2 + $0xa8] sm:$0xff]
    %v80 = vld [vmem:[%s2 + $0xb0] sm:$0xff]
    %v81 = vld [vmem:[%s2 + $0xb8] sm:$0xff]
    %v82 = vld [vmem:[%s2 + $0xc0] sm:$0xff]
    %v83 = vld [vmem:[%s2 + $0xc8] sm:$0xff]
    %v84 = vld [vmem:[%s2 + $0xd0] sm:$0xff]
    %v85 = vld [vmem:[%s2 + $0xd8] sm:$0xff]
    %v86 = vld [vmem:[%s2 + $0xe0] sm:$0xff]
    %v87 = vld [vmem:[%s2 + $0xe8] sm:$0xff]
    %v88 = vld [vmem:[%s2 + $0xf0] sm:$0xff]
    %v89 = vld [vmem:[%s2 + $0xf8] sm:$0xff]
    %91 = vset.pattern.permute.xlu0 0
    %92 = vperm.xlu0 %91, %v58
    %v93 = vpop.permute.xlu0 %92
    %96 = vset.pattern.permute.xlu0 0
    %97 = vperm.xlu0 %96, %v59
    %v98 = vpop.permute.xlu0 %97
    %101 = vset.pattern.permute.xlu0 0
    %102 = vperm.xlu0 %101, %v60
    %v103 = vpop.permute.xlu0 %102
    %106 = vset.pattern.permute.xlu0 0
    %107 = vperm.xlu0 %106, %v61
    %v108 = vpop.permute.xlu0 %107
    %111 = vset.pattern.permute.xlu0 0
    %112 = vperm.xlu0 %111, %v62
    %v113 = vpop.permute.xlu0 %112
    %116 = vset.pattern.permute.xlu0 0
    %117 = vperm.xlu0 %116, %v63
    %v118 = vpop.permute.xlu0 %117
    %121 = vset.pattern.permute.xlu0 0
    %122 = vperm.xlu0 %121, %v64
    %v123 = vpop.permute.xlu0 %122
    %126 = vset.pattern.permute.xlu0 0
    %127 = vperm.xlu0 %126, %v65
    %v128 = vpop.permute.xlu0 %127
    %131 = vset.pattern.permute.xlu0 0
    %132 = vperm.xlu0 %131, %v66
    %v133 = vpop.permute.xlu0 %132
    %136 = vset.pattern.permute.xlu0 0
    %137 = vperm.xlu0 %136, %v67
    %v138 = vpop.permute.xlu0 %137
    %141 = vset.pattern.permute.xlu0 0
    %142 = vperm.xlu0 %141, %v68
    %v143 = vpop.permute.xlu0 %142
    %146 = vset.pattern.permute.xlu0 0
    %147 = vperm.xlu0 %146, %v69
    %v148 = vpop.permute.xlu0 %147
    %151 = vset.pattern.permute.xlu0 0
    %152 = vperm.xlu0 %151, %v70
    %v153 = vpop.permute.xlu0 %152
    %156 = vset.pattern.permute.xlu0 0
    %157 = vperm.xlu0 %156, %v71
    %v158 = vpop.permute.xlu0 %157
    %161 = vset.pattern.permute.xlu0 0
    %162 = vperm.xlu0 %161, %v72
    %v163 = vpop.permute.xlu0 %162
    %166 = vset.pattern.permute.xlu0 0
    %167 = vperm.xlu0 %166, %v73
    %v168 = vpop.permute.xlu0 %167
    %171 = vset.pattern.permute.xlu0 0
    %172 = vperm.xlu0 %171, %v74
    %v173 = vpop.permute.xlu0 %172
    %176 = vset.pattern.permute.xlu0 0
    %177 = vperm.xlu0 %176, %v75
    %v178 = vpop.permute.xlu0 %177
    %181 = vset.pattern.permute.xlu0 0
    %182 = vperm.xlu0 %181, %v76
    %v183 = vpop.permute.xlu0 %182
    %186 = vset.pattern.permute.xlu0 0
    %187 = vperm.xlu0 %186, %v77
    %v188 = vpop.permute.xlu0 %187
    %191 = vset.pattern.permute.xlu0 0
    %192 = vperm.xlu0 %191, %v78
    %v193 = vpop.permute.xlu0 %192
    %196 = vset.pattern.permute.xlu0 0
    %197 = vperm.xlu0 %196, %v79
    %v198 = vpop.permute.xlu0 %197
    %201 = vset.pattern.permute.xlu0 0
    %202 = vperm.xlu0 %201, %v80
    %v203 = vpop.permute.xlu0 %202
    %206 = vset.pattern.permute.xlu0 0
    %207 = vperm.xlu0 %206, %v81
    %v208 = vpop.permute.xlu0 %207
    %211 = vset.pattern.permute.xlu0 0
    %212 = vperm.xlu0 %211, %v82
    %v213 = vpop.permute.xlu0 %212
    %216 = vset.pattern.permute.xlu0 0
    %217 = vperm.xlu0 %216, %v83
    %v218 = vpop.permute.xlu0 %217
    %221 = vset.pattern.permute.xlu0 0
    %222 = vperm.xlu0 %221, %v84
    %v223 = vpop.permute.xlu0 %222
    %226 = vset.pattern.permute.xlu0 0
    %227 = vperm.xlu0 %226, %v85
    %v228 = vpop.permute.xlu0 %227
    %231 = vset.pattern.permute.xlu0 0
    %232 = vperm.xlu0 %231, %v86
    %v233 = vpop.permute.xlu0 %232
    %236 = vset.pattern.permute.xlu0 0
    %237 = vperm.xlu0 %236, %v87
    %v238 = vpop.permute.xlu0 %237
    %241 = vset.pattern.permute.xlu0 0
    %242 = vperm.xlu0 %241, %v88
    %v243 = vpop.permute.xlu0 %242
    %246 = vset.pattern.permute.xlu0 0
    %247 = vperm.xlu0 %246, %v89
    %v248 = vpop.permute.xlu0 %247
    %v282 = vunpack.c.l.b16 %v24
    %v283 = vunpack.c.l.b16 %v25
    %v284 = vunpack.c.l.b16 %v26
    %v285 = vunpack.c.l.b16 %v27
    %v286 = vunpack.c.l.b16 %v28
    %v287 = vunpack.c.l.b16 %v29
    %v288 = vunpack.c.l.b16 %v30
    %v289 = vunpack.c.l.b16 %v31
    %v290 = vunpack.c.l.b16 %v32
    %v291 = vunpack.c.l.b16 %v33
    %v292 = vunpack.c.l.b16 %v34
    %v293 = vunpack.c.l.b16 %v35
    %v294 = vunpack.c.l.b16 %v36
    %v295 = vunpack.c.l.b16 %v37
    %v296 = vunpack.c.l.b16 %v38
    %v297 = vunpack.c.l.b16 %v39
    %v298 = vunpack.c.l.b16 %v40
    %v299 = vunpack.c.l.b16 %v41
    %v300 = vunpack.c.l.b16 %v42
    %v301 = vunpack.c.l.b16 %v43
    %v302 = vunpack.c.l.b16 %v44
    %v303 = vunpack.c.l.b16 %v45
    %v304 = vunpack.c.l.b16 %v46
    %v305 = vunpack.c.l.b16 %v47
    %v306 = vunpack.c.l.b16 %v48
    %v307 = vunpack.c.l.b16 %v49
    %v308 = vunpack.c.l.b16 %v50
    %v309 = vunpack.c.l.b16 %v51
    %v310 = vunpack.c.l.b16 %v52
    %v311 = vunpack.c.l.b16 %v53
    %v312 = vunpack.c.l.b16 %v54
    %v313 = vunpack.c.l.b16 %v55
    %v314 = vpack.c.b16 %v283, %v282
    %v315 = vpack.c.b16 %v285, %v284
    %v316 = vpack.c.b16 %v287, %v286
    %v317 = vpack.c.b16 %v289, %v288
    %v318 = vpack.c.b16 %v291, %v290
    %v319 = vpack.c.b16 %v293, %v292
    %v320 = vpack.c.b16 %v295, %v294
    %v321 = vpack.c.b16 %v297, %v296
    %v322 = vpack.c.b16 %v299, %v298
    %v323 = vpack.c.b16 %v301, %v300
    %v324 = vpack.c.b16 %v303, %v302
    %v325 = vpack.c.b16 %v305, %v304
    %v326 = vpack.c.b16 %v307, %v306
    %v327 = vpack.c.b16 %v309, %v308
    %v328 = vpack.c.b16 %v311, %v310
    %v329 = vpack.c.b16 %v313, %v312
    %v332 = vunpack.c.l.b16 %v56
    %v333 = vunpack.c.l.b16 %v57
    %v334 = vpack.c.b16 %v333, %v332
    %vm335 = vcmask 97280
    %v337 = vsel %vm335, %v314, 0
    %v340 = vsel %vm335, %v315, 0
    %v343 = vsel %vm335, %v316, 0
    %v346 = vsel %vm335, %v317, 0
    %v349 = vsel %vm335, %v318, 0
    %v352 = vsel %vm335, %v319, 0
    %v355 = vsel %vm335, %v320, 0
    %v358 = vsel %vm335, %v321, 0
    %v361 = vsel %vm335, %v322, 0
    %v364 = vsel %vm335, %v323, 0
    %v367 = vsel %vm335, %v324, 0
    %v370 = vsel %vm335, %v325, 0
    %v373 = vsel %vm335, %v326, 0
    %v376 = vsel %vm335, %v327, 0
    %v379 = vsel %vm335, %v328, 0
    %v382 = vsel %vm335, %v329, 0
    %vm384 = vcmask 1045504
    %v386 = vsel %vm384, %v334, 0
    %388 = vmatpush.bf16.msra.mxu0 0
    %389 = vmatpush.bf16.msra.mxu0 0
    %390 = vmatpush.bf16.msra.mxu0 0
    %391 = vmatpush.bf16.msra.mxu0 0
    %392 = vmatpush.bf16.msra.mxu0 0
    %393 = vmatpush.bf16.msra.mxu0 0
    %394 = vmatpush.bf16.msra.mxu0 0
    %395 = vmatpush.bf16.msra.mxu0 %v386
    %396 = vmatmul.bf16.gmra.mxu0 %v337
    %v397 = vpop.f32.mrf.mxu0
    %v398 = vadd.f32 %v93, %v397
    %v399 = vpop.f32.mrf.mxu0
    %v400 = vadd.f32 %v98, %v399
    %401 = vmatmul.bf16.gmra.mxu0 %v340
    %v402 = vpop.f32.mrf.mxu0
    %v403 = vadd.f32 %v103, %v402
    %v404 = vpop.f32.mrf.mxu0
    %v405 = vadd.f32 %v108, %v404
    %406 = vmatmul.bf16.gmra.mxu0 %v343
    %v407 = vpop.f32.mrf.mxu0
    %v408 = vadd.f32 %v113, %v407
    %v409 = vpop.f32.mrf.mxu0
    %v410 = vadd.f32 %v118, %v409
    %411 = vmatmul.bf16.gmra.mxu0 %v346
    %v412 = vpop.f32.mrf.mxu0
    %v413 = vadd.f32 %v123, %v412
    %v414 = vpop.f32.mrf.mxu0
    %v415 = vadd.f32 %v128, %v414
    %416 = vmatmul.bf16.gmra.mxu0 %v349
    %v417 = vpop.f32.mrf.mxu0
    %v418 = vadd.f32 %v133, %v417
    %v419 = vpop.f32.mrf.mxu0
    %v420 = vadd.f32 %v138, %v419
    %421 = vmatmul.bf16.gmra.mxu0 %v352
    %v422 = vpop.f32.mrf.mxu0
    %v423 = vadd.f32 %v143, %v422
    %v424 = vpop.f32.mrf.mxu0
    %v425 = vadd.f32 %v148, %v424
    %426 = vmatmul.bf16.gmra.mxu0 %v355
    %v427 = vpop.f32.mrf.mxu0
    %v428 = vadd.f32 %v153, %v427
    %v429 = vpop.f32.mrf.mxu0
    %v430 = vadd.f32 %v158, %v429
    %431 = vmatmul.bf16.gmra.mxu0 %v358
    %v432 = vpop.f32.mrf.mxu0
    %v433 = vadd.f32 %v163, %v432
    %v434 = vpop.f32.mrf.mxu0
    %v435 = vadd.f32 %v168, %v434
    %436 = vmatmul.bf16.gmra.mxu0 %v361
    %v437 = vpop.f32.mrf.mxu0
    %v438 = vadd.f32 %v173, %v437
    %v439 = vpop.f32.mrf.mxu0
    %v440 = vadd.f32 %v178, %v439
    %441 = vmatmul.bf16.gmra.mxu0 %v364
    %v442 = vpop.f32.mrf.mxu0
    %v443 = vadd.f32 %v183, %v442
    %v444 = vpop.f32.mrf.mxu0
    %v445 = vadd.f32 %v188, %v444
    %446 = vmatmul.bf16.gmra.mxu0 %v367
    %v447 = vpop.f32.mrf.mxu0
    %v448 = vadd.f32 %v193, %v447
    %v449 = vpop.f32.mrf.mxu0
    %v450 = vadd.f32 %v198, %v449
    %451 = vmatmul.bf16.gmra.mxu0 %v370
    %v452 = vpop.f32.mrf.mxu0
    %v453 = vadd.f32 %v203, %v452
    %v454 = vpop.f32.mrf.mxu0
    %v455 = vadd.f32 %v208, %v454
    %456 = vmatmul.bf16.gmra.mxu0 %v373
    %v457 = vpop.f32.mrf.mxu0
    %v458 = vadd.f32 %v213, %v457
    %v459 = vpop.f32.mrf.mxu0
    %v460 = vadd.f32 %v218, %v459
    %461 = vmatmul.bf16.gmra.mxu0 %v376
    %v462 = vpop.f32.mrf.mxu0
    %v463 = vadd.f32 %v223, %v462
    %v464 = vpop.f32.mrf.mxu0
    %v465 = vadd.f32 %v228, %v464
    %466 = vmatmul.bf16.gmra.mxu0 %v379
    %v467 = vpop.f32.mrf.mxu0
    %v468 = vadd.f32 %v233, %v467
    %v469 = vpop.f32.mrf.mxu0
    %v470 = vadd.f32 %v238, %v469
    %471 = vmatmul.bf16.gmra.mxu0 %v382
    %v472 = vpop.f32.mrf.mxu0
    %v473 = vadd.f32 %v243, %v472
    %v474 = vpop.f32.mrf.mxu0
    %v475 = vadd.f32 %v248, %v474
    %476 = vdwg.mxu0
    %v477 = vmax.f32 %v398, 0.0
    %v478 = vmax.f32 %v400, 0.0
    %v479 = vmax.f32 %v403, 0.0
    %v480 = vmax.f32 %v405, 0.0
    %v481 = vmax.f32 %v408, 0.0
    %v482 = vmax.f32 %v410, 0.0
    %v483 = vmax.f32 %v413, 0.0
    %v484 = vmax.f32 %v415, 0.0
    %v485 = vmax.f32 %v418, 0.0
    %v486 = vmax.f32 %v420, 0.0
    %v487 = vmax.f32 %v423, 0.0
    %v488 = vmax.f32 %v425, 0.0
    %v489 = vmax.f32 %v428, 0.0
    %v490 = vmax.f32 %v430, 0.0
    %v491 = vmax.f32 %v433, 0.0
    %v492 = vmax.f32 %v435, 0.0
    %v493 = vmax.f32 %v438, 0.0
    %v494 = vmax.f32 %v440, 0.0
    %v495 = vmax.f32 %v443, 0.0
    %v496 = vmax.f32 %v445, 0.0
    %v497 = vmax.f32 %v448, 0.0
    %v498 = vmax.f32 %v450, 0.0
    %v499 = vmax.f32 %v453, 0.0
    %v500 = vmax.f32 %v455, 0.0
    %v501 = vmax.f32 %v458, 0.0
    %v502 = vmax.f32 %v460, 0.0
    %v503 = vmax.f32 %v463, 0.0
    %v504 = vmax.f32 %v465, 0.0
    %v505 = vmax.f32 %v468, 0.0
    %v506 = vmax.f32 %v470, 0.0
    %v507 = vmax.f32 %v473, 0.0
    %v508 = vmax.f32 %v475, 0.0
    %v509 = vld [vmem:[%s3] sm:$0xff]
    %v510 = vld [vmem:[%s3 + $0x8] sm:$0xff]
    %v511 = vld [vmem:[%s3 + $0x10] sm:$0xff]
    %v512 = vld [vmem:[%s3 + $0x18] sm:$0xff]
    %v513 = vld [vmem:[%s3 + $0x20] sm:$0xff]
    %v514 = vld [vmem:[%s3 + $0x28] sm:$0xff]
    %v515 = vld [vmem:[%s3 + $0x30] sm:$0xff]
    %v516 = vld [vmem:[%s3 + $0x38] sm:$0xff]
    %v517 = vld [vmem:[%s3 + $0x40] sm:$0xff]
    %v518 = vld [vmem:[%s3 + $0x48] sm:$0xff]
    %v519 = vld [vmem:[%s3 + $0x50] sm:$0xff]
    %v520 = vld [vmem:[%s3 + $0x58] sm:$0xff]
    %v521 = vld [vmem:[%s3 + $0x60] sm:$0xff]
    %v522 = vld [vmem:[%s3 + $0x68] sm:$0xff]
    %v523 = vld [vmem:[%s3 + $0x70] sm:$0xff]
    %v524 = vld [vmem:[%s3 + $0x78] sm:$0xff]
    %v525 = vld [vmem:[%s3 + $0x80] sm:$0xff]
    %v526 = vld [vmem:[%s3 + $0x88] sm:$0xff]
    %v527 = vld [vmem:[%s3 + $0x90] sm:$0xff]
    %v528 = vld [vmem:[%s3 + $0x98] sm:$0xff]
    %v529 = vld [vmem:[%s3 + $0xa0] sm:$0xff]
    %v530 = vld [vmem:[%s3 + $0xa8] sm:$0xff]
    %v531 = vld [vmem:[%s3 + $0xb0] sm:$0xff]
    %v532 = vld [vmem:[%s3 + $0xb8] sm:$0xff]
    %v533 = vld [vmem:[%s3 + $0xc0] sm:$0xff]
    %v534 = vld [vmem:[%s3 + $0xc8] sm:$0xff]
    %v535 = vld [vmem:[%s3 + $0xd0] sm:$0xff]
    %v536 = vld [vmem:[%s3 + $0xd8] sm:$0xff]
    %v537 = vld [vmem:[%s3 + $0xe0] sm:$0xff]
    %v538 = vld [vmem:[%s3 + $0xe8] sm:$0xff]
    %v539 = vld [vmem:[%s3 + $0xf0] sm:$0xff]
    %v540 = vld [vmem:[%s3 + $0xf8] sm:$0xff]
    %542 = vset.pattern.permute.xlu0 0
    %543 = vperm.xlu0 %542, %v509
    %v544 = vpop.permute.xlu0 %543
    %547 = vset.pattern.permute.xlu0 0
    %548 = vperm.xlu0 %547, %v510
    %v549 = vpop.permute.xlu0 %548
    %552 = vset.pattern.permute.xlu0 0
    %553 = vperm.xlu0 %552, %v511
    %v554 = vpop.permute.xlu0 %553
    %557 = vset.pattern.permute.xlu0 0
    %558 = vperm.xlu0 %557, %v512
    %v559 = vpop.permute.xlu0 %558
    %562 = vset.pattern.permute.xlu0 0
    %563 = vperm.xlu0 %562, %v513
    %v564 = vpop.permute.xlu0 %563
    %567 = vset.pattern.permute.xlu0 0
    %568 = vperm.xlu0 %567, %v514
    %v569 = vpop.permute.xlu0 %568
    %572 = vset.pattern.permute.xlu0 0
    %573 = vperm.xlu0 %572, %v515
    %v574 = vpop.permute.xlu0 %573
    %577 = vset.pattern.permute.xlu0 0
    %578 = vperm.xlu0 %577, %v516
    %v579 = vpop.permute.xlu0 %578
    %582 = vset.pattern.permute.xlu0 0
    %583 = vperm.xlu0 %582, %v517
    %v584 = vpop.permute.xlu0 %583
    %587 = vset.pattern.permute.xlu0 0
    %588 = vperm.xlu0 %587, %v518
    %v589 = vpop.permute.xlu0 %588
    %592 = vset.pattern.permute.xlu0 0
    %593 = vperm.xlu0 %592, %v519
    %v594 = vpop.permute.xlu0 %593
    %597 = vset.pattern.permute.xlu0 0
    %598 = vperm.xlu0 %597, %v520
    %v599 = vpop.permute.xlu0 %598
    %602 = vset.pattern.permute.xlu0 0
    %603 = vperm.xlu0 %602, %v521
    %v604 = vpop.permute.xlu0 %603
    %607 = vset.pattern.permute.xlu0 0
    %608 = vperm.xlu0 %607, %v522
    %v609 = vpop.permute.xlu0 %608
    %612 = vset.pattern.permute.xlu0 0
    %613 = vperm.xlu0 %612, %v523
    %v614 = vpop.permute.xlu0 %613
    %617 = vset.pattern.permute.xlu0 0
    %618 = vperm.xlu0 %617, %v524
    %v619 = vpop.permute.xlu0 %618
    %622 = vset.pattern.permute.xlu0 0
    %623 = vperm.xlu0 %622, %v525
    %v624 = vpop.permute.xlu0 %623
    %627 = vset.pattern.permute.xlu0 0
    %628 = vperm.xlu0 %627, %v526
    %v629 = vpop.permute.xlu0 %628
    %632 = vset.pattern.permute.xlu0 0
    %633 = vperm.xlu0 %632, %v527
    %v634 = vpop.permute.xlu0 %633
    %637 = vset.pattern.permute.xlu0 0
    %638 = vperm.xlu0 %637, %v528
    %v639 = vpop.permute.xlu0 %638
    %642 = vset.pattern.permute.xlu0 0
    %643 = vperm.xlu0 %642, %v529
    %v644 = vpop.permute.xlu0 %643
    %647 = vset.pattern.permute.xlu0 0
    %648 = vperm.xlu0 %647, %v530
    %v649 = vpop.permute.xlu0 %648
    %652 = vset.pattern.permute.xlu0 0
    %653 = vperm.xlu0 %652, %v531
    %v654 = vpop.permute.xlu0 %653
    %657 = vset.pattern.permute.xlu0 0
    %658 = vperm.xlu0 %657, %v532
    %v659 = vpop.permute.xlu0 %658
    %662 = vset.pattern.permute.xlu0 0
    %663 = vperm.xlu0 %662, %v533
    %v664 = vpop.permute.xlu0 %663
    %667 = vset.pattern.permute.xlu0 0
    %668 = vperm.xlu0 %667, %v534
    %v669 = vpop.permute.xlu0 %668
    %672 = vset.pattern.permute.xlu0 0
    %673 = vperm.xlu0 %672, %v535
    %v674 = vpop.permute.xlu0 %673
    %677 = vset.pattern.permute.xlu0 0
    %678 = vperm.xlu0 %677, %v536
    %v679 = vpop.permute.xlu0 %678
    %682 = vset.pattern.permute.xlu0 0
    %683 = vperm.xlu0 %682, %v537
    %v684 = vpop.permute.xlu0 %683
    %687 = vset.pattern.permute.xlu0 0
    %688 = vperm.xlu0 %687, %v538
    %v689 = vpop.permute.xlu0 %688
    %692 = vset.pattern.permute.xlu0 0
    %693 = vperm.xlu0 %692, %v539
    %v694 = vpop.permute.xlu0 %693
    %697 = vset.pattern.permute.xlu0 0
    %698 = vperm.xlu0 %697, %v540
    %v699 = vpop.permute.xlu0 %698
    %v701 = vmul.f32 %v477, %v544
    %v702 = vmul.f32 %v478, %v549
    %v703 = vmul.f32 %v479, %v554
    %v704 = vmul.f32 %v480, %v559
    %v705 = vmul.f32 %v481, %v564
    %v706 = vmul.f32 %v482, %v569
    %v707 = vmul.f32 %v483, %v574
    %v708 = vmul.f32 %v484, %v579
    %v709 = vmul.f32 %v485, %v584
    %v710 = vmul.f32 %v486, %v589
    %v711 = vmul.f32 %v487, %v594
    %v712 = vmul.f32 %v488, %v599
    %v713 = vmul.f32 %v489, %v604
    %v714 = vmul.f32 %v490, %v609
    %v715 = vmul.f32 %v491, %v614
    %v716 = vmul.f32 %v492, %v619
    %v717 = vmul.f32 %v493, %v624
    %v718 = vmul.f32 %v494, %v629
    %v719 = vmul.f32 %v495, %v634
    %v720 = vmul.f32 %v496, %v639
    %v721 = vmul.f32 %v497, %v644
    %v722 = vmul.f32 %v498, %v649
    %v723 = vmul.f32 %v499, %v654
    %v724 = vmul.f32 %v500, %v659
    %v725 = vmul.f32 %v501, %v664
    %v726 = vmul.f32 %v502, %v669
    %v727 = vmul.f32 %v503, %v674
    %v728 = vmul.f32 %v504, %v679
    %v729 = vmul.f32 %v505, %v684
    %v730 = vmul.f32 %v506, %v689
    %v731 = vmul.f32 %v507, %v694
    %v732 = vmul.f32 %v508, %v699
    %vm733 = vcmask 64512
    %v734 = vsel %vm733, %v701, 0.0
    %v735 = vsel %vm733, %v702, 0.0
    %v736 = vadd.f32 %v734, %v735
    %v737 = vsel %vm733, %v703, 0.0
    %v738 = vadd.f32 %v736, %v737
    %v739 = vsel %vm733, %v704, 0.0
    %v740 = vadd.f32 %v738, %v739
    %v741 = vsel %vm733, %v705, 0.0
    %v742 = vadd.f32 %v740, %v741
    %v743 = vsel %vm733, %v706, 0.0
    %v744 = vadd.f32 %v742, %v743
    %v745 = vsel %vm733, %v707, 0.0
    %v746 = vadd.f32 %v744, %v745
    %v747 = vsel %vm733, %v708, 0.0
    %v748 = vadd.f32 %v746, %v747
    %v749 = vsel %vm733, %v709, 0.0
    %v750 = vadd.f32 %v748, %v749
    %v751 = vsel %vm733, %v710, 0.0
    %v752 = vadd.f32 %v750, %v751
    %v753 = vsel %vm733, %v711, 0.0
    %v754 = vadd.f32 %v752, %v753
    %v755 = vsel %vm733, %v712, 0.0
    %v756 = vadd.f32 %v754, %v755
    %v757 = vsel %vm733, %v713, 0.0
    %v758 = vadd.f32 %v756, %v757
    %v759 = vsel %vm733, %v714, 0.0
    %v760 = vadd.f32 %v758, %v759
    %v761 = vsel %vm733, %v715, 0.0
    %v762 = vadd.f32 %v760, %v761
    %v763 = vsel %vm733, %v716, 0.0
    %v764 = vadd.f32 %v762, %v763
    %v765 = vsel %vm733, %v717, 0.0
    %v766 = vadd.f32 %v764, %v765
    %v767 = vsel %vm733, %v718, 0.0
    %v768 = vadd.f32 %v766, %v767
    %v769 = vsel %vm733, %v719, 0.0
    %v770 = vadd.f32 %v768, %v769
    %v771 = vsel %vm733, %v720, 0.0
    %v772 = vadd.f32 %v770, %v771
    %v773 = vsel %vm733, %v721, 0.0
    %v774 = vadd.f32 %v772, %v773
    %v775 = vsel %vm733, %v722, 0.0
    %v776 = vadd.f32 %v774, %v775
    %v777 = vsel %vm733, %v723, 0.0
    %v778 = vadd.f32 %v776, %v777
    %v779 = vsel %vm733, %v724, 0.0
    %v780 = vadd.f32 %v778, %v779
    %v781 = vsel %vm733, %v725, 0.0
    %v782 = vadd.f32 %v780, %v781
    %v783 = vsel %vm733, %v726, 0.0
    %v784 = vadd.f32 %v782, %v783
    %v785 = vsel %vm733, %v727, 0.0
    %v786 = vadd.f32 %v784, %v785
    %v787 = vsel %vm733, %v728, 0.0
    %v788 = vadd.f32 %v786, %v787
    %v789 = vsel %vm733, %v729, 0.0
    %v790 = vadd.f32 %v788, %v789
    %v791 = vsel %vm733, %v730, 0.0
    %v792 = vadd.f32 %v790, %v791
    %v793 = vsel %vm733, %v731, 0.0
    %v794 = vadd.f32 %v792, %v793
    %v795 = vsel %vm733, %v732, 0.0
    %v796 = vadd.f32 %v794, %v795
    %v797 = vrot.slane %v796, 4
    %v798 = vadd.f32 %v796, %v797
    %v799 = vrot.slane %v798, 2
    %v800 = vadd.f32 %v798, %v799
    %v801 = vrot.slane %v800, 1
    %v802 = vadd.f32 %v800, %v801
    %v803 = vld [vmem:[#allocation2] sm:$0x1]
    %805 = vset.pattern.permute.xlu0 0
    %806 = vperm.xlu0 %805, %v803
    %v807 = vpop.permute.xlu0 %806
    %v809 = vperm.slane %v807, 0
    %v810 = vadd.f32 %v802, %v809
    %v811 = vsub.f32 0.0, %v810
    %v812 = vmul.f32 %v811, 1.442695
    %v813 = vpow.pop %v812
    %v814 = vadd.f32 %v813, 1.0
    %v815 = vrcp.pop %v814
    %vm816 = vcmask 57344
    %817 = vst.msk [vmem:[#allocation3] sm:$0x1] %vm816, %v815
    // Predicated region
    $region22: #{adult_classifier.1} parent=1 // pred_check
      _
    $region23: #{adult_classifier.1} parent=1 // pred_check_branch
      %819 = sbr.rel (0) target = $region25
    $region24: #{adult_classifier.1} parent=1 // pred_region
      %821 = vsyncadd [#allocation4], 0
      %s823 = sshll.u32 [#allocation3], 4
      %s824 = int_to_ptr.vmem [resolvable:$true] %s823
      %s825 = sshll.u32 %s5, 4
      %s826 = int_to_ptr.hbm [resolvable:$true] %s825
      %828 = dma.vmem_to_hbm [thread:$0]  %s824, 16, %s826, [#allocation4]
    $region25: #{adult_classifier.1} parent=1 // pred_fallthru
      _
    // Predicated region
    $region26: #{adult_classifier.1} parent=1 // pred_check
      _
    $region27: #{adult_classifier.1} parent=1 // pred_check_branch
      %830 = sbr.rel (0) target = $region29
    $region28: #{adult_classifier.1} parent=1 // pred_region
      %832 = dma.done [#allocation4], 16
    $region29: #{adult_classifier.1} parent=1 // pred_fallthru
      _
    %833 = vsyncpa [#allocation4], 1

</llo_original>
